<compile_context>
chip_gen: v7x
topology: tpu7x:2x2x1
jax: 0.10.0
libtpu: 0.0.40
codegen_flags: <defaults>
</compile_context>

<pallas_src>
import functools
import math

import jax
import jax.numpy as jnp
from jax import lax
from jax.experimental import pallas as pl
from jax.experimental.pallas import tpu as pltpu


# ---------------------------------------------------------------------------
# Kernel
# ---------------------------------------------------------------------------
def _pretrain_head_kernel(x_ref, w_ref, o_ref, *, tv, n):
    # x_ref: (tv, d_model, tp)   untransposed input slice for one batch element
    # w_ref: (d_model, n)        stacked per-class weights, column order l*num_classes + c
    # o_ref: (tp, tv * n)        rows = patches, lanes = (var, patch_len, class)
    w = w_ref[...]
    for v in range(tv):  # tv is a small compile-time constant; offsets stay static
        lhs = x_ref[v].astype(w.dtype)  # (d_model, tp): bf16 cast, no materialized transpose
        # Contract lhs dim 0 against w dim 0 -> (tp, n); transpose(2,3) folded into MXU feed.
        y = lax.dot_general(
            lhs, w,
            dimension_numbers=(((0,), (0,)), ((), ())),
            preferred_element_type=jnp.float32,
        )
        o_ref[:, v * n:(v + 1) * n] = y.astype(o_ref.dtype)


# ---------------------------------------------------------------------------
# Tiling / VMEM heuristics
# ---------------------------------------------------------------------------
def _round_down(x: int, m: int) -> int:
    return (x // m) * m


def _vmem_limit_bytes() -> int:
    """Scoped VMEM limit derived from the chip (64 MiB on v7x, 128 MiB v5e/v6e)."""
    cap = 64 * 1024 * 1024
    try:
        info = pltpu.get_tpu_info()
        cap = int(getattr(info, "vmem_capacity_bytes", cap))
    except Exception:
        pass
    return max(32 * 1024 * 1024, min((cap * 3) // 4, 96 * 1024 * 1024))


def _per_step_vmem(tv, tp, d_model, n, x_bytes, out_bytes) -> int:
    x_blk = tv * d_model * tp * x_bytes        # input block
    o_blk = tp * tv * n * out_bytes            # output block
    w_res = d_model * n * 2                    # resident bf16 weight
    temps = tp * d_model * 2 + tp * n * 4      # bf16 lhs + f32 matmul result
    # double-buffered I/O blocks + resident weight + a few live per-v temporaries
    return 2 * (x_blk + o_blk) + w_res + 3 * temps


def _choose_patch_tile(num_patch: int) -> int:
    if num_patch <= 512:
        return num_patch          # full-extent block: always layout-legal
    return 512                    # 128-aligned; ragged last tile is masked on writeback


def _shrink_patch_tile(tp: int):
    if tp <= 128:
        return None
    new = max(128, _round_down(tp // 2, 128))
    return new if new < tp else None


def _var_tile_candidates(nvars: int, n: int):
    """tv values whose output block (tp, tv*n) is layout-legal, best first."""
    g = 128 // math.gcd(n, 128)   # smallest tv with (tv * n) % 128 == 0
    cands = []
    if nvars * n <= 8192:         # full-variable slab: lane-dense, no ragged edge
        cands.append(nvars)
    if g <= nvars:
        for k in range(min(nvars // g, 8), 0, -1):
            cands.append(k * g)
    cands.append(nvars)           # full-extent fallback is always layout-legal
    seen, out = set(), []
    for tv in cands:
        if tv not in seen:
            seen.add(tv)
            out.append(tv)
    return out


# ---------------------------------------------------------------------------
# Wrapper
# ---------------------------------------------------------------------------
def pretrain_head_forward(x, weights, *, compute_dtype=jnp.bfloat16, out_dtype=None):
    """
    x:       [bs, nvars, d_model, num_patch]
    weights: [num_classes, patch_len, d_model]  (stacked nn.Linear weights, bias=False)
    returns: [bs, num_patch, nvars, patch_len, num_classes]
    """
    bs, nvars, d_model, num_patch = x.shape
    num_classes, patch_len, d_model_w = weights.shape
    assert d_model == d_model_w
    n = patch_len * num_classes

    # Stack the per-class Linear weights into one (d_model, n) matrix with
    # column order (l, c) -> l*num_classes + c (matches cat(..., dim=-1)).
    w = jnp.transpose(weights, (2, 1, 0)).reshape(d_model, n).astype(compute_dtype)

    out_dtype = x.dtype if out_dtype is None else out_dtype
    x_bytes = jnp.dtype(x.dtype).itemsize
    out_bytes = jnp.dtype(out_dtype).itemsize

    vmem_limit = _vmem_limit_bytes()
    budget = (vmem_limit * 3) // 4

    # Pick (tv, tp): largest layout-legal variable tile that fits the budget,
    # shrinking the patch tile if necessary.
    tp = _choose_patch_tile(num_patch)
    cand_list = _var_tile_candidates(nvars, n)
    tv = None
    while tv is None:
        for cand in cand_list:
            if _per_step_vmem(cand, tp, d_model, n, x_bytes, out_bytes) <= budget:
                tv = cand
                break
        if tv is None:
            new_tp = _shrink_patch_tile(tp)
            if new_tp is None:
                tv = min(cand_list)   # over budget even at tp=128: smallest legal tile
            else:
                tp = new_tp

    n_vt = pl.cdiv(nvars, tv)
    n_pt = pl.cdiv(num_patch, tp)

    # Megacore guard (v7x has 2 TensorCores): keep >= 2 parallel grid steps.
    if bs * n_vt * n_pt < 2:
        new_tp = _shrink_patch_tile(tp)
        if new_tp is not None:
            tp = new_tp
            n_pt = pl.cdiv(num_patch, tp)

    kernel = functools.partial(_pretrain_head_kernel, tv=tv, n=n)

    out = pl.pallas_call(
        kernel,
        out_shape=jax.ShapeDtypeStruct((bs, num_patch, nvars * n), out_dtype),
        grid_spec=pltpu.PrefetchScalarGridSpec(
            num_scalar_prefetch=0,
            grid=(bs, n_vt, n_pt),
            in_specs=[
                # Untransposed x, tiled over (batch, var-tile, patch-tile).
                pl.BlockSpec((None, tv, d_model, tp),
                             lambda b, vt, pt: (b, vt, 0, pt)),
                # Whole stacked weight; block index never changes -> VMEM-resident.
                pl.BlockSpec((d_model, n), lambda b, vt, pt: (0, 0)),
            ],
            # permute(0,2,1,3,4) fused here: grid (b, vt, pt) -> output block (b, pt, vt).
            out_specs=pl.BlockSpec((None, tp, tv * n),
                                   lambda b, vt, pt: (b, pt, vt)),
        ),
        compiler_params=pltpu.CompilerParams(
            dimension_semantics=("parallel", "parallel", "parallel"),
            vmem_limit_bytes=int(vmem_limit),
        ),
    )(x, w)

    # Free, contiguous reshape: (var, patch_len, class) lanes -> explicit axes.
    return out.reshape(bs, num_patch, nvars, patch_len, num_classes)


# ---------------------------------------------------------------------------
# Pure-JAX reference (mirrors the PyTorch code, same bf16-input rounding)
# ---------------------------------------------------------------------------
def _reference_forward(x, weights, compute_dtype=jnp.bfloat16):
    xt = jnp.transpose(x, (0, 1, 3, 2)).astype(compute_dtype)   # [bs, nvars, num_patch, d_model]
    w = weights.astype(compute_dtype)
    outs = []
    for c in range(weights.shape[0]):
        yc = jnp.einsum("bvpd,ld->bvpl", xt, w[c],
                        preferred_element_type=jnp.float32).astype(x.dtype)
        outs.append(yc[..., None])
    y = jnp.concatenate(outs, axis=-1)            # [bs, nvars, num_patch, patch_len, num_classes]
    return jnp.transpose(y, (0, 2, 1, 3, 4))      # [bs, num_patch, nvars, patch_len, num_classes]


if __name__ == "__main__":
    # Small shapes consistent with the module.
    bs, nvars, d_model, num_patch = 2, 4, 32, 8
    patch_len, num_classes = 16, 3
    # TODO(synk): nn.Dropout is identity in eval mode; only the eval-mode forward is implemented.

    key = jax.random.PRNGKey(0)
    kx, kw = jax.random.split(key)

    x = jax.random.normal(kx, (bs, nvars, d_model, num_patch), dtype=jnp.float32)
    # Deterministic stand-in for the num_classes Linear(d_model -> patch_len, bias=False) weights.
    weights = (
        jax.random.normal(kw, (num_classes, patch_len, d_model), dtype=jnp.float32)
        / jnp.sqrt(jnp.float32(d_model))
    )

    out = jax.block_until_ready(pretrain_head_forward(x, weights))
    assert out.shape == (bs, num_patch, nvars, patch_len, num_classes), out.shape

    ref = _reference_forward(x, weights)
    assert jnp.allclose(out, ref, atol=2e-2, rtol=2e-2), float(jnp.max(jnp.abs(out - ref)))

    print("KERNEL_OK")
</pallas_src>

<mosaic_0001>
module attributes {stable_mosaic.version = 11 : i64} {
  func.func @_pretrain_head_kernel(%arg0: i32, %arg1: i32, %arg2: i32, %arg3: memref<1x4x32x8xf32, #tpu.memory_space<vmem>>, %arg4: memref<32x48xbf16, #tpu.memory_space<vmem>>, %arg5: memref<1x8x192xf32, #tpu.memory_space<vmem>>) attributes {dimension_semantics = [#tpu.dimension_semantics<parallel>, #tpu.dimension_semantics<parallel>, #tpu.dimension_semantics<parallel>], iteration_bounds = array<i64: 2, 1, 1>, scalar_prefetch = 0 : i64, scratch_operands = 0 : i64, tpu.core_type = #tpu.core_type<tc>, window_params = [{transform_indices = @transform_0, window_bounds = array<i64: 1, 4, 32, 8>}, {pipeline_mode = #tpu.pipeline_mode<synchronous>, transform_indices = @transform_1, window_bounds = array<i64: 32, 48>}, {transform_indices = @transform_2, window_bounds = array<i64: 1, 8, 192>}]} {
    %c0 = arith.constant 0 : index
    %c0_0 = arith.constant 0 : index
    %0 = vector.load %arg4[%c0, %c0_0] : memref<32x48xbf16, #tpu.memory_space<vmem>>, vector<32x48xbf16>
    %c0_1 = arith.constant 0 : index
    %c0_2 = arith.constant 0 : index
    %c0_3 = arith.constant 0 : index
    %c0_4 = arith.constant 0 : index
    %1 = vector.load %arg3[%c0_1, %c0_2, %c0_3, %c0_4] : memref<1x4x32x8xf32, #tpu.memory_space<vmem>>, vector<1x1x32x8xf32>
    %2 = vector.shape_cast %1 : vector<1x1x32x8xf32> to vector<32x8xf32>
    %3 = arith.truncf %2 : vector<32x8xf32> to vector<32x8xbf16>
    %cst = arith.constant dense<0.000000e+00> : vector<8x48xf32>
    %4 = tpu.matmul %3, %0, %cst {dimension_numbers = #tpu.dot_dimension_numbers<[0], [0], [1], [1], [0, 1, 1, 1], [], []>} : vector<32x8xbf16>, vector<32x48xbf16>, vector<8x48xf32> -> vector<8x48xf32>
    %c0_5 = arith.constant 0 : index
    %c0_6 = arith.constant 0 : index
    %c0_7 = arith.constant 0 : index
    %5 = vector.load %arg5[%c0_5, %c0_6, %c0_7] : memref<1x8x192xf32, #tpu.memory_space<vmem>>, vector<1x8x48xf32>
    %6 = vector.shape_cast %5 : vector<1x8x48xf32> to vector<8x48xf32>
    %7 = vector.shape_cast %4 : vector<8x48xf32> to vector<1x8x48xf32>
    tpu.vector_store %arg5[%c0_5, %c0_6, %c0_7], %7 {strides = array<i32>} : memref<1x8x192xf32, #tpu.memory_space<vmem>>, vector<1x8x48xf32>,
    %c0_8 = arith.constant 0 : index
    %c1 = arith.constant 1 : index
    %c0_9 = arith.constant 0 : index
    %c0_10 = arith.constant 0 : index
    %8 = vector.load %arg3[%c0_8, %c1, %c0_9, %c0_10] : memref<1x4x32x8xf32, #tpu.memory_space<vmem>>, vector<1x1x32x8xf32>
    %9 = vector.shape_cast %8 : vector<1x1x32x8xf32> to vector<32x8xf32>
    %10 = arith.truncf %9 : vector<32x8xf32> to vector<32x8xbf16>
    %cst_11 = arith.constant dense<0.000000e+00> : vector<8x48xf32>
    %11 = tpu.matmul %10, %0, %cst_11 {dimension_numbers = #tpu.dot_dimension_numbers<[0], [0], [1], [1], [0, 1, 1, 1], [], []>} : vector<32x8xbf16>, vector<32x48xbf16>, vector<8x48xf32> -> vector<8x48xf32>
    %c0_12 = arith.constant 0 : index
    %c0_13 = arith.constant 0 : index
    %c48 = arith.constant 48 : index
    %12 = vector.load %arg5[%c0_12, %c0_13, %c48] : memref<1x8x192xf32, #tpu.memory_space<vmem>>, vector<1x8x48xf32>
    %13 = vector.shape_cast %12 : vector<1x8x48xf32> to vector<8x48xf32>
    %14 = vector.shape_cast %11 : vector<8x48xf32> to vector<1x8x48xf32>
    tpu.vector_store %arg5[%c0_12, %c0_13, %c48], %14 {strides = array<i32>} : memref<1x8x192xf32, #tpu.memory_space<vmem>>, vector<1x8x48xf32>,
    %c0_14 = arith.constant 0 : index
    %c2 = arith.constant 2 : index
    %c0_15 = arith.constant 0 : index
    %c0_16 = arith.constant 0 : index
    %15 = vector.load %arg3[%c0_14, %c2, %c0_15, %c0_16] : memref<1x4x32x8xf32, #tpu.memory_space<vmem>>, vector<1x1x32x8xf32>
    %16 = vector.shape_cast %15 : vector<1x1x32x8xf32> to vector<32x8xf32>
    %17 = arith.truncf %16 : vector<32x8xf32> to vector<32x8xbf16>
    %cst_17 = arith.constant dense<0.000000e+00> : vector<8x48xf32>
    %18 = tpu.matmul %17, %0, %cst_17 {dimension_numbers = #tpu.dot_dimension_numbers<[0], [0], [1], [1], [0, 1, 1, 1], [], []>} : vector<32x8xbf16>, vector<32x48xbf16>, vector<8x48xf32> -> vector<8x48xf32>
    %c0_18 = arith.constant 0 : index
    %c0_19 = arith.constant 0 : index
    %c96 = arith.constant 96 : index
    %19 = vector.load %arg5[%c0_18, %c0_19, %c96] : memref<1x8x192xf32, #tpu.memory_space<vmem>>, vector<1x8x48xf32>
    %20 = vector.shape_cast %19 : vector<1x8x48xf32> to vector<8x48xf32>
    %21 = vector.shape_cast %18 : vector<8x48xf32> to vector<1x8x48xf32>
    tpu.vector_store %arg5[%c0_18, %c0_19, %c96], %21 {strides = array<i32>} : memref<1x8x192xf32, #tpu.memory_space<vmem>>, vector<1x8x48xf32>,
    %c0_20 = arith.constant 0 : index
    %c3 = arith.constant 3 : index
    %c0_21 = arith.constant 0 : index
    %c0_22 = arith.constant 0 : index
    %22 = vector.load %arg3[%c0_20, %c3, %c0_21, %c0_22] : memref<1x4x32x8xf32, #tpu.memory_space<vmem>>, vector<1x1x32x8xf32>
    %23 = vector.shape_cast %22 : vector<1x1x32x8xf32> to vector<32x8xf32>
    %24 = arith.truncf %23 : vector<32x8xf32> to vector<32x8xbf16>
    %cst_23 = arith.constant dense<0.000000e+00> : vector<8x48xf32>
    %25 = tpu.matmul %24, %0, %cst_23 {dimension_numbers = #tpu.dot_dimension_numbers<[0], [0], [1], [1], [0, 1, 1, 1], [], []>} : vector<32x8xbf16>, vector<32x48xbf16>, vector<8x48xf32> -> vector<8x48xf32>
    %c0_24 = arith.constant 0 : index
    %c0_25 = arith.constant 0 : index
    %c144 = arith.constant 144 : index
    %26 = vector.load %arg5[%c0_24, %c0_25, %c144] : memref<1x8x192xf32, #tpu.memory_space<vmem>>, vector<1x8x48xf32>
    %27 = vector.shape_cast %26 : vector<1x8x48xf32> to vector<8x48xf32>
    %28 = vector.shape_cast %25 : vector<8x48xf32> to vector<1x8x48xf32>
    tpu.vector_store %arg5[%c0_24, %c0_25, %c144], %28 {strides = array<i32>} : memref<1x8x192xf32, #tpu.memory_space<vmem>>, vector<1x8x48xf32>,
    return
  }
  func.func @transform_0(%arg0: i32, %arg1: i32, %arg2: i32) -> (i32, i32, i32, i32) {
    %c0_i32 = arith.constant 0 : i32
    %c0_i32_0 = arith.constant 0 : i32
    return %arg0, %arg1, %c0_i32, %arg2 : i32, i32, i32, i32
  }
  func.func @transform_1(%arg0: i32, %arg1: i32, %arg2: i32) -> (i32, i32) {
    %c0_i32 = arith.constant 0 : i32
    %c0_i32_0 = arith.constant 0 : i32
    %c0_i32_1 = arith.constant 0 : i32
    return %c0_i32, %c0_i32_0 : i32, i32
  }
  func.func @transform_2(%arg0: i32, %arg1: i32, %arg2: i32) -> (i32, i32, i32) {
    %c0_i32 = arith.constant 0 : i32
    return %arg0, %arg2, %arg1 : i32, i32, i32
  }
}

</mosaic_0001>

<llo_original>
// kernel: tpu_custom_call.1
$region0: #{tpu_custom_call.1}
  #allocation0 [shape = 'u32[]', space=smem, size = 0x4, offset = 0x4, fixed_abs, tag = 'smem constant byte address 0x4 - core index']
  #allocation1 [shape = 'u32[144,128]{1,0:T(1,128)}', space=vmem, size = 0x12000, scoped, tag = 'internal scratch']
  %s0 = inlined_call_operand.vmem [shape: f32[2,4,32,8], index: 0, kind: input, shape index: {}]
  %s1 = inlined_call_operand.vmem [shape: bf16[32,48], index: 1, kind: input, shape index: {}]
  %s2 = inlined_call_operand.hbm [shape: f32[2,8,192], index: 2, kind: output, shape index: {}]
  %s3 = sld [smem:[#allocation0]]
  $region41: #{tpu_custom_call.1} parent=0
    _
  %s5 = ssub.s32 1, %s3
  %s6 = scalar_select 0, %s5, %s3
  $region1: #{tpu_custom_call.1} parent=0
    #allocation2 [shape = 'u8[16384]{0}', space=vmem, size = 0x4000, scoped, tag = 'output window, operand 0']
    #allocation3 [shape = 's32[2]{0}', space=sflag, size = 0x8, scoped, tag = 'scoped memory for tpu_custom_call.1']
    %7 = vsyncpa [#allocation3], 0
    %s8 = scalar_lea.sflag [#allocation3], 1
    %9 = vsyncpa %s8, 0
    loop: start=0, step=1, limit=4
    $region2: #{tpu_custom_call.1} parent=1 // loop_pre_header
      _
    $region3: #{tpu_custom_call.1} parent=1 // loop_header
      %s11 = sphi 0, %s15
      %p12 = scmp.ge.s32.totalorder %s11, 4
      %s18 = sphi 0, %s37
      %s19 = sphi 0, %s33
      %s20 = sphi 0, %s29
      %s21 = sphi 0, %s18
      %s22 = sphi 0, %s19
      %s23 = sphi 0, %s20
      %s24 = sphi 0, %s21
      %s25 = sphi 0, %s22
      %s26 = sphi 0, %s23
      %s44 = sphi 0, %s46
      %s47 = sphi 0, %s44
      %s48 = sphi 0, %s47
      %s64 = sphi 0, %s48
      %s68 = sphi 0, %s68
      %s70 = sphi 0, %s68
      %s71 = sphi 0, %s70
      %s85 = sphi 0, %s71
      %s95 = sphi 0, %s97
      %s98 = sphi 0, %s95
      %s99 = sphi 0, %s98
      %s115 = sphi 0, %s99
    $region4: #{tpu_custom_call.1} parent=1 // loop_header_branch
      %14 = sbr.rel (%p12) target = $region8
    $region5: #{tpu_custom_call.1} parent=1 // loop_body
      %s16 = ssub.s32 %s11, 1
      %s17 = ssub.s32 %s11, 2
      %s27 = sadd.s32 1, %s20
      %p28 = scmp.ge.s32.totalorder %s27, 1
      %s29 = scalar_select %p28, 0, %s27
      %s30 = sadd.s32 1, %s19
      %s31 = scalar_select %p28, %s30, %s19
      %p32 = scmp.ge.s32.totalorder %s31, 1
      %s33 = scalar_select %p32, 0, %s31
      %s34 = sadd.s32 1, %s18
      %s35 = scalar_select %p32, %s34, %s18
      %p36 = scmp.ge.s32.totalorder %s35, 2
      %s37 = scalar_select %p36, 0, %s35
      %s38 = ssub.s32 %s18, %s37
      %s39 = ssub.s32 %s19, %s33
      %s40 = sor.u32 %s38, %s39
      %s41 = ssub.s32 %s20, %s29
      %s42 = sor.u32 %s40, %s41
      %p43 = scmp.eq.s32.totalorder %s42, 0
      %s45 = sadd.s32 %s44, 1
      %s46 = scalar_select %p43, %s44, %s45
      %p49 = pneg %p43
      %p50 = scmp.eq.s32.totalorder %s11, 1
      %p51 = por %p49, %p50
      %p52 = scmp.ne.s32.totalorder %s44, %s47
      %p53 = scmp.eq.s32.totalorder %s11, 0
      %p54 = por %p52, %p53
      %p55 = scmp.ne.s32.totalorder %s44, %s47
      %p56 = scmp.eq.s32.totalorder %s16, 1
      %p57 = por %p55, %p56
      %p58 = scmp.ne.s32.totalorder %s47, %s48
      %p59 = scmp.eq.s32.totalorder %s16, 0
      %p60 = por %p58, %p59
      %p61 = scmp.ne.s32.totalorder %s47, %s48
      %p62 = scmp.eq.s32.totalorder %s17, 1
      %p63 = por %p61, %p62
      %p65 = scmp.ne.s32.totalorder %s48, %s64
      %p66 = scmp.eq.s32.totalorder %s17, 0
      %p67 = por %p65, %p66
      %s69 = sadd.s32 %s68, 1
      %p72 = scmp.eq.s32.totalorder %s11, 1
      %p73 = scmp.ne.s32.totalorder %s68, %s70
      %p74 = scmp.eq.s32.totalorder %s11, 0
      %p75 = por %p73, %p74
      %p76 = scmp.ne.s32.totalorder %s68, %s70
      %p77 = scmp.eq.s32.totalorder %s16, 1
      %p78 = por %p76, %p77
      %p79 = scmp.ne.s32.totalorder %s70, %s71
      %p80 = scmp.eq.s32.totalorder %s16, 0
      %p81 = por %p79, %p80
      %p82 = scmp.ne.s32.totalorder %s70, %s71
      %p83 = scmp.eq.s32.totalorder %s17, 1
      %p84 = por %p82, %p83
      %p86 = scmp.ne.s32.totalorder %s71, %s85
      %p87 = scmp.eq.s32.totalorder %s17, 0
      %p88 = por %p86, %p87
      %s89 = ssub.s32 %s18, %s37
      %s90 = ssub.s32 %s20, %s29
      %s91 = sor.u32 %s89, %s90
      %s92 = ssub.s32 %s19, %s33
      %s93 = sor.u32 %s91, %s92
      %p94 = scmp.eq.s32.totalorder %s93, 0
      %s96 = sadd.s32 %s95, 1
      %s97 = scalar_select %p94, %s95, %s96
      %p100 = pneg %p94
      %p101 = scmp.eq.s32.totalorder %s11, 1
      %p102 = por %p100, %p101
      %p103 = scmp.ne.s32.totalorder %s95, %s98
      %p104 = scmp.eq.s32.totalorder %s11, 0
      %p105 = por %p103, %p104
      %p106 = scmp.ne.s32.totalorder %s95, %s98
      %p107 = scmp.eq.s32.totalorder %s16, 1
      %p108 = por %p106, %p107
      %p109 = scmp.ne.s32.totalorder %s98, %s99
      %p110 = scmp.eq.s32.totalorder %s16, 0
      %p111 = por %p109, %p110
      %p112 = scmp.ne.s32.totalorder %s98, %s99
      %p113 = scmp.eq.s32.totalorder %s17, 1
      %p114 = por %p112, %p113
      %p116 = scmp.ne.s32.totalorder %s99, %s115
      %p117 = scmp.eq.s32.totalorder %s17, 0
      %p118 = por %p116, %p117
      %p119 = scmp.le.s32.totalorder 1, %s11
      %p120 = scmp.lt.s32.totalorder %s11, 3
      %p121 = pnand %p119, %p120
      %p122 = pneg %p121
      // Predicated region
      $region9: #{tpu_custom_call.1} parent=5 // pred_check
        _
      $region10: #{tpu_custom_call.1} parent=5 // pred_check_branch
        %124 = sbr.rel (%p121) target = $region12
      $region11: #{tpu_custom_call.1} parent=5 // pred_region
        %s125 = ssub.s32 %s11, 1
        // Predicated region
        $region13: #{tpu_custom_call.1} parent=11 // pred_check
          %p126 = pneg %p81
        $region14: #{tpu_custom_call.1} parent=11 // pred_check_branch
          %128 = sbr.rel (%p126) target = $region16
        $region15: #{tpu_custom_call.1} parent=11 // pred_region
          _
        $region16: #{tpu_custom_call.1} parent=11 // pred_fallthru
          _
      $region12: #{tpu_custom_call.1} parent=5 // pred_fallthru
        _
      %p129 = scmp.lt.s32.totalorder %s11, 2
      // Predicated region
      $region17: #{tpu_custom_call.1} parent=5 // pred_check
        %p130 = pneg %p129
      $region18: #{tpu_custom_call.1} parent=5 // pred_check_branch
        %132 = sbr.rel (%p130) target = $region20
      $region19: #{tpu_custom_call.1} parent=5 // pred_region
        // Predicated region
        $region21: #{tpu_custom_call.1} parent=19 // pred_check
          %p133 = pneg %p54
        $region22: #{tpu_custom_call.1} parent=19 // pred_check_branch
          %135 = sbr.rel (%p133) target = $region24
        $region23: #{tpu_custom_call.1} parent=19 // pred_region
          %s136 = smul.u32 4, %s19
          %p137 = scmp.lt.s32.totalorder %s18, 1
          %s138 = scalar_select %p137, %s18, 1
          %p139 = scmp.lt.s32.totalorder %s136, 3
          %s140 = scalar_select %p139, %s136, 3
          %p141 = scmp.lt.s32.totalorder %s20, 0
          %s142 = scalar_select %p141, %s20, 0
          %s143 = smul.addr %s140, 4
          %s144 = sadd.s32 %s142, %s143
          %s145 = smul.addr %s138, 16
          %s146 = sadd.s32 %s144, %s145
          %s147 = smul.addr %s146, 8
          %s148 = scalar_lea.vmem %s0, %s147
          %s149 = smul.u32 4, %s19
        $region24: #{tpu_custom_call.1} parent=19 // pred_fallthru
          _
      $region20: #{tpu_custom_call.1} parent=5 // pred_fallthru
        _
      %p150 = scmp.le.s32.totalorder 1, %s11
      %p151 = scmp.lt.s32.totalorder %s11, 3
      %p152 = pnand %p150, %p151
      %p153 = pneg %p152
      // Predicated region
      $region25: #{tpu_custom_call.1} parent=5 // pred_check
        _
      $region26: #{tpu_custom_call.1} parent=5 // pred_check_branch
        %155 = sbr.rel (%p152) target = $region28
      $region27: #{tpu_custom_call.1} parent=5 // pred_region
        %s156 = ssub.s32 %s11, 1
        %s157 = smul.u32 4, %s22
        %p158 = scmp.lt.s32.totalorder %s21, 1
        %s159 = scalar_select %p158, %s21, 1
        %p160 = scmp.lt.s32.totalorder %s157, 3
        %s161 = scalar_select %p160, %s157, 3
        %p162 = scmp.lt.s32.totalorder %s23, 0
        %s163 = scalar_select %p162, %s23, 0
        %s164 = smul.addr %s161, 4
        %s165 = sadd.s32 %s163, %s164
        %s166 = smul.addr %s159, 16
        %s167 = sadd.s32 %s165, %s166
        %s168 = smul.addr %s167, 8
        %s169 = scalar_lea.vmem %s0, %s168
        %p170 = pneg %p60
        %p171 = pneg %p57
        %p172 = pneg %p81
        %p173 = pneg %p78
        %p174 = pneg %p111
        %p175 = pneg %p108
        %s176 = sand.u32 %s98, 1
        %s177 = scalar_lea.sflag [#allocation3], %s176
        %s178 = sand.u32 %s98, 1
        %s179 = smul.addr %s178, 16
        %s180 = scalar_lea.vmem [#allocation2], %s179
        %s181 = smul.u32 4, %s22
        %p182 = scmp.lt.s32.totalorder %s21, 1
        %s183 = scalar_select %p182, %s21, 1
        %p184 = scmp.lt.s32.totalorder %s181, 3
        %s185 = scalar_select %p184, %s181, 3
        %p186 = scmp.lt.s32.totalorder %s23, 0
        %s187 = scalar_select %p186, %s23, 0
        %s188 = smul.addr %s185, 4
        %s189 = sadd.s32 %s187, %s188
        %s190 = smul.addr %s183, 16
        %s191 = sadd.s32 %s189, %s190
        %s192 = smul.addr %s191, 8
        %s193 = scalar_lea.vmem %s0, %s192
        %s194 = smul.u32 4, %s22
        %s195 = smul.u32 2, %s22
        %v197 = vld [vmem:[%s1] sm:$0xf]
        %v198 = vld [vmem:[%s1 + $0x4] sm:$0xf]
        %v199 = vld [vmem:[%s1 + $0x8] sm:$0xf]
        %v200 = vld [vmem:[%s1 + $0xc] sm:$0xf]
        %v201 = vld [vmem:[%s193] sm:$0xff]
        %v202 = vld [vmem:[%s193 + $0x8] sm:$0xff]
        %v203 = vld [vmem:[%s193 + $0x10] sm:$0xff]
        %v204 = vld [vmem:[%s193 + $0x18] sm:$0xff]
        %v205 = vpack.c.bf16 %v202, %v201
        %v206 = vpack.c.bf16 %v204, %v203
        %207 = vxpose.xlu0.c.b16.start [1/8] %v205, 128
        %208 = vxpose.xlu0.c.b16.cont [2/8] %v206, 128
        %209 = vxpose.xlu0.c.b16.cont [3/8] 0, 128
        %210 = vxpose.xlu0.c.b16.cont [4/8] 0, 128
        %211 = vxpose.xlu0.c.b16.cont [5/8] 0, 128
        %212 = vxpose.xlu0.c.b16.cont [6/8] 0, 128
        %213 = vxpose.xlu0.c.b16.cont [7/8] 0, 128
        %214 = vxpose.xlu0.c.b16.end [8/8] 0, 128
        %v215 = vpop.trf.xlu0
        %v216 = vpop.trf.xlu0
        %v217 = vpop.trf.xlu0
        %v218 = vpop.trf.xlu0
        %v219 = vpop.trf.xlu0
        %v220 = vpop.trf.xlu0
        %v221 = vpop.trf.xlu0
        %v222 = vpop.trf.xlu0
        %v227 = vunpack.c.l.b16 %v197
        %v228 = vunpack.c.l.b16 %v198
        %v229 = vunpack.c.l.b16 %v199
        %v230 = vunpack.c.l.b16 %v200
        %v231 = vpack.c.b16 %v228, %v227
        %v232 = vpack.c.b16 %v230, %v229
        %vm235 = vcmask 261120
        %v237 = vsel %vm235, %v215, 0
        %239 = vmatprep.subr.bf16.mxu0 0
        %240 = vmatpush1.bf16.msra.mxu0 %v231
        %241 = vmatprep.subr.bf16.mxu0 0
        %242 = vmatpush1.bf16.msra.mxu0 %v232
        %243 = vmatprep.subr.bf16.mxu0 0
        %244 = vmatpush1.bf16.msra.mxu0 0
        %245 = vmatprep.subr.bf16.mxu0 0
        %246 = vmatpush1.bf16.msra.mxu0 0
        %247 = vmatprep.subr.bf16.mxu0 0
        %248 = vmatpush1.bf16.msra.mxu0 0
        %249 = vmatprep.subr.bf16.mxu0 0
        %250 = vmatpush1.bf16.msra.mxu0 0
        %251 = vmatprep.subr.bf16.mxu0 0
        %252 = vmatpush1.bf16.msra.mxu0 0
        %253 = vmatprep.subr.bf16.mxu0 0
        %254 = vmatpush1.bf16.msra.mxu0 0
        %255 = vmatprep.subr.bf16.mxu0 0
        %256 = vmatpush1.bf16.msra.mxu0 0
        %257 = vmatprep.subr.bf16.mxu0 0
        %258 = vmatpush1.bf16.msra.mxu0 0
        %259 = vmatprep.subr.bf16.mxu0 0
        %260 = vmatpush1.bf16.msra.mxu0 0
        %261 = vmatprep.subr.bf16.mxu0 0
        %262 = vmatpush1.bf16.msra.mxu0 0
        %263 = vmatprep.subr.bf16.mxu0 0
        %264 = vmatpush1.bf16.msra.mxu0 0
        %265 = vmatprep.subr.bf16.mxu0 0
        %266 = vmatpush1.bf16.msra.mxu0 0
        %267 = vmatprep.subr.bf16.mxu0 0
        %268 = vmatpush1.bf16.msra.mxu0 0
        %269 = vmatprep.subr.bf16.mxu0 0
        %270 = vmatpush1.bf16.msra.mxu0 0
        %271 = vmatprep.mubr.bf16.mxu0 0
        %272 = vmatmul.mubr.bf16.gmra.mrb[0].mxu0 %v237
        %v273 = vpop.f32.mrb[0].mxu0
        %v274 = vadd.f32 0.0, %v273
        %v275 = vpop.f32.mrb[0].mxu0
        %v276 = vpop.f32.mrb[0].mxu0
        %v277 = vpop.f32.mrb[0].mxu0
        %278 = vdwg.mxu0
        %vm279 = vcmask 392192
        %280 = vst.msk [vmem:[%s180] sm:$0xff] %vm279, %v274
        %s281 = scalar_lea.vmem %s193, 32
        %v282 = vld [vmem:[%s281] sm:$0xff]
        %v283 = vld [vmem:[%s281 + $0x8] sm:$0xff]
        %v284 = vld [vmem:[%s281 + $0x10] sm:$0xff]
        %v285 = vld [vmem:[%s281 + $0x18] sm:$0xff]
        %v286 = vpack.c.bf16 %v283, %v282
        %v287 = vpack.c.bf16 %v285, %v284
        %288 = vxpose.xlu0.c.b16.start [1/8] %v286, 128
        %289 = vxpose.xlu0.c.b16.cont [2/8] %v287, 128
        %290 = vxpose.xlu0.c.b16.cont [3/8] 0, 128
        %291 = vxpose.xlu0.c.b16.cont [4/8] 0, 128
        %292 = vxpose.xlu0.c.b16.cont [5/8] 0, 128
        %293 = vxpose.xlu0.c.b16.cont [6/8] 0, 128
        %294 = vxpose.xlu0.c.b16.cont [7/8] 0, 128
        %295 = vxpose.xlu0.c.b16.end [8/8] 0, 128
        %v296 = vpop.trf.xlu0
        %v297 = vpop.trf.xlu0
        %v298 = vpop.trf.xlu0
        %v299 = vpop.trf.xlu0
        %v300 = vpop.trf.xlu0
        %v301 = vpop.trf.xlu0
        %v302 = vpop.trf.xlu0
        %v303 = vpop.trf.xlu0
        %v305 = vsel %vm235, %v296, 0
        %307 = vmatprep.subr.bf16.mxu0 0
        %308 = vmatpush1.bf16.msra.mxu0 %v231
        %309 = vmatprep.subr.bf16.mxu0 0
        %310 = vmatpush1.bf16.msra.mxu0 %v232
        %311 = vmatprep.subr.bf16.mxu0 0
        %312 = vmatpush1.bf16.msra.mxu0 0
        %313 = vmatprep.subr.bf16.mxu0 0
        %314 = vmatpush1.bf16.msra.mxu0 0
        %315 = vmatprep.subr.bf16.mxu0 0
        %316 = vmatpush1.bf16.msra.mxu0 0
        %317 = vmatprep.subr.bf16.mxu0 0
        %318 = vmatpush1.bf16.msra.mxu0 0
        %319 = vmatprep.subr.bf16.mxu0 0
        %320 = vmatpush1.bf16.msra.mxu0 0
        %321 = vmatprep.subr.bf16.mxu0 0
        %322 = vmatpush1.bf16.msra.mxu0 0
        %323 = vmatprep.subr.bf16.mxu0 0
        %324 = vmatpush1.bf16.msra.mxu0 0
        %325 = vmatprep.subr.bf16.mxu0 0
        %326 = vmatpush1.bf16.msra.mxu0 0
        %327 = vmatprep.subr.bf16.mxu0 0
        %328 = vmatpush1.bf16.msra.mxu0 0
        %329 = vmatprep.subr.bf16.mxu0 0
        %330 = vmatpush1.bf16.msra.mxu0 0
        %331 = vmatprep.subr.bf16.mxu0 0
        %332 = vmatpush1.bf16.msra.mxu0 0
        %333 = vmatprep.subr.bf16.mxu0 0
        %334 = vmatpush1.bf16.msra.mxu0 0
        %335 = vmatprep.subr.bf16.mxu0 0
        %336 = vmatpush1.bf16.msra.mxu0 0
        %337 = vmatprep.subr.bf16.mxu0 0
        %338 = vmatpush1.bf16.msra.mxu0 0
        %339 = vmatprep.mubr.bf16.mxu0 0
        %340 = vmatmul.mubr.bf16.gmra.mrb[0].mxu0 %v305
        %v341 = vpop.f32.mrb[0].mxu0
        %v342 = vadd.f32 0.0, %v341
        %v343 = vpop.f32.mrb[0].mxu0
        %v344 = vpop.f32.mrb[0].mxu0
        %v345 = vpop.f32.mrb[0].mxu0
        %346 = vdwg.mxu0
        %348 = vrot.lane.b32.xlu0 %v342, 48
        %v349 = vpop.permute.xlu0 %348
        %vm351 = vcmask 785792
        %352 = vst.msk [vmem:[%s180] sm:$0xff] %vm351, %v349
        %s353 = scalar_lea.vmem %s193, 64
        %v354 = vld [vmem:[%s353] sm:$0xff]
        %v355 = vld [vmem:[%s353 + $0x8] sm:$0xff]
        %v356 = vld [vmem:[%s353 + $0x10] sm:$0xff]
        %v357 = vld [vmem:[%s353 + $0x18] sm:$0xff]
        %v358 = vpack.c.bf16 %v355, %v354
        %v359 = vpack.c.bf16 %v357, %v356
        %360 = vxpose.xlu0.c.b16.start [1/8] %v358, 128
        %361 = vxpose.xlu0.c.b16.cont [2/8] %v359, 128
        %362 = vxpose.xlu0.c.b16.cont [3/8] 0, 128
        %363 = vxpose.xlu0.c.b16.cont [4/8] 0, 128
        %364 = vxpose.xlu0.c.b16.cont [5/8] 0, 128
        %365 = vxpose.xlu0.c.b16.cont [6/8] 0, 128
        %366 = vxpose.xlu0.c.b16.cont [7/8] 0, 128
        %367 = vxpose.xlu0.c.b16.end [8/8] 0, 128
        %v368 = vpop.trf.xlu0
        %v369 = vpop.trf.xlu0
        %v370 = vpop.trf.xlu0
        %v371 = vpop.trf.xlu0
        %v372 = vpop.trf.xlu0
        %v373 = vpop.trf.xlu0
        %v374 = vpop.trf.xlu0
        %v375 = vpop.trf.xlu0
        %v377 = vsel %vm235, %v368, 0
        %379 = vmatprep.subr.bf16.mxu0 0
        %380 = vmatpush1.bf16.msra.mxu0 %v231
        %381 = vmatprep.subr.bf16.mxu0 0
        %382 = vmatpush1.bf16.msra.mxu0 %v232
        %383 = vmatprep.subr.bf16.mxu0 0
        %384 = vmatpush1.bf16.msra.mxu0 0
        %385 = vmatprep.subr.bf16.mxu0 0
        %386 = vmatpush1.bf16.msra.mxu0 0
        %387 = vmatprep.subr.bf16.mxu0 0
        %388 = vmatpush1.bf16.msra.mxu0 0
        %389 = vmatprep.subr.bf16.mxu0 0
        %390 = vmatpush1.bf16.msra.mxu0 0
        %391 = vmatprep.subr.bf16.mxu0 0
        %392 = vmatpush1.bf16.msra.mxu0 0
        %393 = vmatprep.subr.bf16.mxu0 0
        %394 = vmatpush1.bf16.msra.mxu0 0
        %395 = vmatprep.subr.bf16.mxu0 0
        %396 = vmatpush1.bf16.msra.mxu0 0
        %397 = vmatprep.subr.bf16.mxu0 0
        %398 = vmatpush1.bf16.msra.mxu0 0
        %399 = vmatprep.subr.bf16.mxu0 0
        %400 = vmatpush1.bf16.msra.mxu0 0
        %401 = vmatprep.subr.bf16.mxu0 0
        %402 = vmatpush1.bf16.msra.mxu0 0
        %403 = vmatprep.subr.bf16.mxu0 0
        %404 = vmatpush1.bf16.msra.mxu0 0
        %405 = vmatprep.subr.bf16.mxu0 0
        %406 = vmatpush1.bf16.msra.mxu0 0
        %407 = vmatprep.subr.bf16.mxu0 0
        %408 = vmatpush1.bf16.msra.mxu0 0
        %409 = vmatprep.subr.bf16.mxu0 0
        %410 = vmatpush1.bf16.msra.mxu0 0
        %411 = vmatprep.mubr.bf16.mxu0 0
        %412 = vmatmul.mubr.bf16.gmra.mrb[0].mxu0 %v377
        %v413 = vpop.f32.mrb[0].mxu0
        %v414 = vadd.f32 0.0, %v413
        %v415 = vpop.f32.mrb[0].mxu0
        %v416 = vpop.f32.mrb[0].mxu0
        %v417 = vpop.f32.mrb[0].mxu0
        %418 = vdwg.mxu0
        %420 = vrot.lane.b32.xlu0 %v414, 96
        %v421 = vpop.permute.xlu0 %420
        %vm423 = vcmask 1048320
        %424 = vst.msk [vmem:[%s180] sm:$0xff] %vm423, %v421
        %vm425 = vcmask 130048
        %426 = vst.msk [vmem:[%s180 + $0x8] sm:$0xff] %vm425, %v421
        %s427 = scalar_lea.vmem %s193, 96
        %v428 = vld [vmem:[%s427] sm:$0xff]
        %v429 = vld [vmem:[%s427 + $0x8] sm:$0xff]
        %v430 = vld [vmem:[%s427 + $0x10] sm:$0xff]
        %v431 = vld [vmem:[%s427 + $0x18] sm:$0xff]
        %v432 = vpack.c.bf16 %v429, %v428
        %v433 = vpack.c.bf16 %v431, %v430
        %434 = vxpose.xlu0.c.b16.start [1/8] %v432, 128
        %435 = vxpose.xlu0.c.b16.cont [2/8] %v433, 128
        %436 = vxpose.xlu0.c.b16.cont [3/8] 0, 128
        %437 = vxpose.xlu0.c.b16.cont [4/8] 0, 128
        %438 = vxpose.xlu0.c.b16.cont [5/8] 0, 128
        %439 = vxpose.xlu0.c.b16.cont [6/8] 0, 128
        %440 = vxpose.xlu0.c.b16.cont [7/8] 0, 128
        %441 = vxpose.xlu0.c.b16.end [8/8] 0, 128
        %v442 = vpop.trf.xlu0
        %v443 = vpop.trf.xlu0
        %v444 = vpop.trf.xlu0
        %v445 = vpop.trf.xlu0
        %v446 = vpop.trf.xlu0
        %v447 = vpop.trf.xlu0
        %v448 = vpop.trf.xlu0
        %v449 = vpop.trf.xlu0
        %v451 = vsel %vm235, %v442, 0
        %453 = vmatprep.subr.bf16.mxu0 0
        %454 = vmatpush1.bf16.msra.mxu0 %v231
        %455 = vmatprep.subr.bf16.mxu0 0
        %456 = vmatpush1.bf16.msra.mxu0 %v232
        %457 = vmatprep.subr.bf16.mxu0 0
        %458 = vmatpush1.bf16.msra.mxu0 0
        %459 = vmatprep.subr.bf16.mxu0 0
        %460 = vmatpush1.bf16.msra.mxu0 0
        %461 = vmatprep.subr.bf16.mxu0 0
        %462 = vmatpush1.bf16.msra.mxu0 0
        %463 = vmatprep.subr.bf16.mxu0 0
        %464 = vmatpush1.bf16.msra.mxu0 0
        %465 = vmatprep.subr.bf16.mxu0 0
        %466 = vmatpush1.bf16.msra.mxu0 0
        %467 = vmatprep.subr.bf16.mxu0 0
        %468 = vmatpush1.bf16.msra.mxu0 0
        %469 = vmatprep.subr.bf16.mxu0 0
        %470 = vmatpush1.bf16.msra.mxu0 0
        %471 = vmatprep.subr.bf16.mxu0 0
        %472 = vmatpush1.bf16.msra.mxu0 0
        %473 = vmatprep.subr.bf16.mxu0 0
        %474 = vmatpush1.bf16.msra.mxu0 0
        %475 = vmatprep.subr.bf16.mxu0 0
        %476 = vmatpush1.bf16.msra.mxu0 0
        %477 = vmatprep.subr.bf16.mxu0 0
        %478 = vmatpush1.bf16.msra.mxu0 0
        %479 = vmatprep.subr.bf16.mxu0 0
        %480 = vmatpush1.bf16.msra.mxu0 0
        %481 = vmatprep.subr.bf16.mxu0 0
        %482 = vmatpush1.bf16.msra.mxu0 0
        %483 = vmatprep.subr.bf16.mxu0 0
        %484 = vmatpush1.bf16.msra.mxu0 0
        %485 = vmatprep.mubr.bf16.mxu0 0
        %486 = vmatmul.mubr.bf16.gmra.mrb[0].mxu0 %v451
        %v487 = vpop.f32.mrb[0].mxu0
        %v488 = vadd.f32 0.0, %v487
        %v489 = vpop.f32.mrb[0].mxu0
        %v490 = vpop.f32.mrb[0].mxu0
        %v491 = vpop.f32.mrb[0].mxu0
        %492 = vdwg.mxu0
        %494 = vrot.lane.b32.xlu0 %v488, 16
        %v495 = vpop.permute.xlu0 %494
        %vm497 = vcmask 523392
        %498 = vst.msk [vmem:[%s180 + $0x8] sm:$0xff] %vm497, %v495
        %s499 = sand.u32 %s98, 1
        %s500 = scalar_lea.sflag [#allocation3], %s499
        %s501 = sand.u32 %s98, 1
        %s502 = smul.addr %s501, 16
        %s503 = scalar_lea.vmem [#allocation2], %s502
        // Predicated region
        $region29: #{tpu_custom_call.1} parent=27 // pred_check
          %p504 = pneg %p108
        $region30: #{tpu_custom_call.1} parent=27 // pred_check_branch
          %506 = sbr.rel (%p504) target = $region32
        $region31: #{tpu_custom_call.1} parent=27 // pred_region
          %s507 = smul.u32 2, %s22
          %s509 = ssub.s32 256, 256
          %510 = vsyncadd %s500, %s509
          %s511 = smul.addr %s23, 2
          %s512 = sadd.s32 %s507, %s511
          %s513 = smul.addr %s21, 2
          %s514 = sadd.s32 %s512, %s513
          %s515 = smul.addr %s514, 128
          %s516 = scalar_lea.hbm %s2, %s515
          %s518 = sshll.u32 %s503, 4
          %s519 = int_to_ptr.vmem [resolvable:$true] %s518
          %521 = dma.vmem_to_hbm [thread:$0]  %s519, 256, %s516, %s500
        $region32: #{tpu_custom_call.1} parent=27 // pred_fallthru
          _
      $region28: #{tpu_custom_call.1} parent=5 // pred_fallthru
        _
      %p522 = scmp.le.s32.totalorder 2, %s11
      // Predicated region
      $region33: #{tpu_custom_call.1} parent=5 // pred_check
        %p523 = pneg %p522
      $region34: #{tpu_custom_call.1} parent=5 // pred_check_branch
        %525 = sbr.rel (%p523) target = $region36
      $region35: #{tpu_custom_call.1} parent=5 // pred_region
        %s526 = ssub.s32 %s11, 2
        // Predicated region
        $region37: #{tpu_custom_call.1} parent=35 // pred_check
          %p527 = pneg %p114
        $region38: #{tpu_custom_call.1} parent=35 // pred_check_branch
          %529 = sbr.rel (%p527) target = $region40
        $region39: #{tpu_custom_call.1} parent=35 // pred_region
          %s530 = sand.u32 %s99, 1
          %s531 = scalar_lea.sflag [#allocation3], %s530
          %s532 = sand.u32 %s99, 1
          %s533 = smul.addr %s532, 16
          %s534 = scalar_lea.vmem [#allocation2], %s533
          %535 = dma.done %s531, 256
        $region40: #{tpu_custom_call.1} parent=35 // pred_fallthru
          _
      $region36: #{tpu_custom_call.1} parent=5 // pred_fallthru
        _
    $region6: #{tpu_custom_call.1} parent=1 // loop_footer
      %s15 = sadd.s32 1, %s11
    $region7: #{tpu_custom_call.1} parent=1 // loop_footer_branch
      %10 = sbr.rel target = $region3
    $region8: #{tpu_custom_call.1} parent=1 // loop_exit
      _
    %536 = vsyncpa [#allocation3], 1
    %s537 = scalar_lea.sflag [#allocation3], 1
    %538 = vsyncpa %s537, 1

</llo_original>
